<compile_context>
chip_gen: v7x
topology: tpu7x:2x2x1
jax: 0.10.0
libtpu: 0.0.40
codegen_flags: <defaults>
</compile_context>

<pallas_src>
import math
import functools

import jax
import jax.numpy as jnp
from jax import lax
from jax.experimental import pallas as pl
from jax.experimental.pallas import tpu as pltpu


def _round_up(x, m):
    return (x + m - 1) // m * m


# ---------------------------------------------------------------------------
# Kernel 1: ResNet18 forward tail  (flatten -> l2_norm, matching torch.div(x, ||x||))
# ---------------------------------------------------------------------------
def _l2_norm_kernel(x_ref, o_ref):
    x = x_ref[...]
    ss = jnp.sum(x * x, axis=-1, keepdims=True)      # (TB, 1)
    o_ref[...] = (x * lax.rsqrt(ss)).astype(o_ref.dtype)


def resnet18_embedding_head(feat, *, block_b=128):
    """feat: (B, C, 1, 1) or (B, C) pooled features -> (B, C) l2-normalized."""
    assert block_b % 8 == 0
    B = feat.shape[0]
    x = feat.reshape(B, -1).astype(jnp.float32)
    C = x.shape[1]
    C_pad = _round_up(C, 128)
    TB = _round_up(B, 8) if B <= block_b else block_b
    B_pad = _round_up(B, TB)
    x_p = jnp.pad(x, ((0, B_pad - B), (0, C_pad - C)))

    out = pl.pallas_call(
        _l2_norm_kernel,
        out_shape=jax.ShapeDtypeStruct((B_pad, C_pad), jnp.float32),
        grid_spec=pltpu.PrefetchScalarGridSpec(
            num_scalar_prefetch=0,
            grid=(B_pad // TB,),
            in_specs=[pl.BlockSpec((TB, C_pad), lambda i: (i, 0))],
            out_specs=pl.BlockSpec((TB, C_pad), lambda i: (i, 0)),
        ),
        compiler_params=pltpu.CompilerParams(
            dimension_semantics=("parallel",),
            vmem_limit_bytes=32 << 20,
        ),
    )(x_p)
    return out[:B, :C]


# ---------------------------------------------------------------------------
# Kernel 2: ArcMarginProduct (ArcFace) head
# ---------------------------------------------------------------------------
def _arc_margin_kernel(x_ref, w_ref, wrinv_ref, label_ref, out_ref, *,
                       s, cos_m, sin_m, th, mm, easy_margin, block_n):
    x = x_ref[...]          # (TB, D)  f32 or bf16
    w = w_ref[...]          # (TN, D)  f32 or bf16

    # Row-norm reciprocal from the tile already in VMEM (single EUP rsqrt).
    xf = x.astype(jnp.float32)
    xss = jnp.sum(xf * xf, axis=-1, keepdims=True)                 # (TB, 1)
    rinv_x = lax.rsqrt(jnp.maximum(xss, jnp.float32(1e-24)))       # = 1/max(||x||,1e-12)

    # Raw dot with contraction over the last dim of both operands (no transpose),
    # normalization folded into an output scale.
    raw = lax.dot_general(x, w, (((1,), (1,)), ((), ())),
                          preferred_element_type=jnp.float32)      # (TB, TN)
    cosine = raw * rinv_x * wrinv_ref[...]                         # (TB,1)*(1,TN) scales

    # phi = cos(theta + m); clamp 1 - cos^2 to avoid NaN at |cos| ~ 1 + eps.
    sine = jnp.sqrt(jnp.clip(1.0 - cosine * cosine, 0.0, 1.0))
    phi = cosine * cos_m - sine * sin_m
    if easy_margin:
        phi = jnp.where(cosine > 0.0, phi, cosine)
    else:
        phi = jnp.where(cosine > th, phi, cosine - mm)

    # Single vselect instead of the float one-hot blend.
    label = label_ref[...]                                         # (TB, 1) int32
    col = pl.program_id(1) * block_n + lax.broadcasted_iota(jnp.int32, cosine.shape, 1)
    out_ref[...] = (jnp.where(col == label, phi, cosine) * s).astype(out_ref.dtype)


def arc_margin_product(x, weight, label, *, s=30.0, m=0.5, easy_margin=False,
                       block_b=128, block_n=2048, use_bf16=False):
    """x: (B, in_features), weight: (out_features, in_features), label: (B,) int.
    Returns (B, out_features) f32 = s * (one_hot*phi + (1-one_hot)*cosine)."""
    B, D = x.shape
    N, D2 = weight.shape
    assert D == D2
    assert block_b % 8 == 0 and block_n % 128 == 0

    x = x.astype(jnp.float32)
    weight = weight.astype(jnp.float32)

    # Lane/sublane alignment (zero padding is numerically inert for norms & dot).
    D_pad = _round_up(D, 128)
    TB = _round_up(B, 8) if B <= block_b else block_b
    B_pad = _round_up(B, TB)
    TN = min(block_n, _round_up(N, 128))
    N_pad = _round_up(N, TN)

    x_p = jnp.pad(x, ((0, B_pad - B), (0, D_pad - D)))
    w_p = jnp.pad(weight, ((0, N_pad - N), (0, D_pad - D)))
    lab_p = jnp.pad(label.astype(jnp.int32).reshape(B, 1),
                    ((0, B_pad - B), (0, 0)), constant_values=-1)  # -1 never matches

    # Class-norm reciprocals, computed once and hoisted out of the batch grid;
    # shaped (1, N_pad) so they broadcast along the lane (class) axis in-kernel.
    wss = jnp.sum(w_p * w_p, axis=1)[None, :]
    w_rinv = lax.rsqrt(jnp.maximum(wss, 1e-24))

    if use_bf16:  # opt-in: halves weight DMA, native bf16 MXU; f32 accumulate.
        x_p = x_p.astype(jnp.bfloat16)
        w_p = w_p.astype(jnp.bfloat16)

    kernel = functools.partial(
        _arc_margin_kernel,
        s=float(s),
        cos_m=math.cos(m),
        sin_m=math.sin(m),
        th=math.cos(math.pi - m),
        mm=math.sin(math.pi - m) * m,
        easy_margin=easy_margin,
        block_n=TN,
    )

    grid = (B_pad // TB, N_pad // TN)
    out = pl.pallas_call(
        kernel,
        out_shape=jax.ShapeDtypeStruct((B_pad, N_pad), jnp.float32),
        grid_spec=pltpu.PrefetchScalarGridSpec(
            num_scalar_prefetch=0,
            grid=grid,
            in_specs=[
                pl.BlockSpec((TB, D_pad), lambda i, j: (i, 0)),   # x tile
                pl.BlockSpec((TN, D_pad), lambda i, j: (j, 0)),   # weight tile (streamed)
                pl.BlockSpec((1, TN), lambda i, j: (0, j)),       # class-norm rinv
                pl.BlockSpec((TB, 1), lambda i, j: (i, 0)),       # labels
            ],
            out_specs=pl.BlockSpec((TB, TN), lambda i, j: (i, j)),
        ),
        compiler_params=pltpu.CompilerParams(
            # Both axes independent -> shardable across v7x's two TensorCores.
            dimension_semantics=("parallel", "parallel"),
            # Tiles sized to stay under ~32 MiB scoped VMEM (safe on v7x's 64 MiB);
            # raise together with block_n on v6e/v5e (128 MiB VMEM).
            vmem_limit_bytes=32 << 20,
        ),
    )(x_p, w_p, w_rinv, lab_p)
    return out[:B, :N]


# ---------------------------------------------------------------------------
# Pure-JAX references
# ---------------------------------------------------------------------------
def _arc_margin_reference(x, weight, label, *, s=30.0, m=0.5, easy_margin=False):
    eps = 1e-12
    x_n = x / jnp.maximum(jnp.linalg.norm(x, axis=1, keepdims=True), eps)
    w_n = weight / jnp.maximum(jnp.linalg.norm(weight, axis=1, keepdims=True), eps)
    cosine = x_n @ w_n.T
    sine = jnp.sqrt(jnp.clip(1.0 - cosine ** 2, 0.0, 1.0))
    phi = cosine * math.cos(m) - sine * math.sin(m)
    if easy_margin:
        phi = jnp.where(cosine > 0, phi, cosine)
    else:
        phi = jnp.where(cosine > math.cos(math.pi - m),
                        phi, cosine - math.sin(math.pi - m) * m)
    one_hot = jax.nn.one_hot(label, weight.shape[0], dtype=cosine.dtype)
    return (one_hot * phi + (1.0 - one_hot) * cosine) * s


if __name__ == "__main__":
    key = jax.random.PRNGKey(0)
    k_feat, _ = jax.random.split(key)

    # ---- ResNet18 forward tail: (B, 512, 1, 1) pooled features -> l2-normalized embedding
    B = 8
    feat = jax.random.normal(k_feat, (B, 512, 1, 1), dtype=jnp.float32)
    emb = jax.block_until_ready(resnet18_embedding_head(feat))
    flat = feat.reshape(B, -1)
    ref_emb = flat / jnp.linalg.norm(flat, axis=1, keepdims=True)
    assert emb.shape == (B, 512)
    assert jnp.allclose(emb, ref_emb, atol=1e-4, rtol=1e-4), "l2_norm mismatch"

    # ---- ArcFace margin head: real 5-class cassava head + a multi-tile config
    configs = [
        # (B, in_features, out_features, block_b, block_n, easy_margin)
        (8, 64, 5, 128, 2048, False),   # N=5 padded to 128 lanes, single tile
        (20, 130, 384, 8, 128, True),   # B/D padding + 3x3 (batch, class) tile grid
    ]
    for (Bi, Di, Ni, bb, bn, ez) in configs:
        kx, kw, kl = jax.random.split(jax.random.fold_in(key, Ni), 3)
        xi = jax.random.normal(kx, (Bi, Di), dtype=jnp.float32)
        limit = math.sqrt(6.0 / (Di + Ni))  # xavier_uniform_ range
        wi = jax.random.uniform(kw, (Ni, Di), dtype=jnp.float32,
                                minval=-limit, maxval=limit)
        li = jax.random.randint(kl, (Bi,), 0, Ni, dtype=jnp.int32)

        out = arc_margin_product(xi, wi, li, s=30.0, m=0.5, easy_margin=ez,
                                 block_b=bb, block_n=bn)
        out = jax.block_until_ready(out)
        ref = _arc_margin_reference(xi, wi, li, s=30.0, m=0.5, easy_margin=ez)
        assert out.shape == (Bi, Ni)
        assert jnp.allclose(out, ref, atol=5e-4, rtol=5e-4), \
            f"arc margin mismatch at config {(Bi, Di, Ni)}"

    print("KERNEL_OK")
</pallas_src>

<mosaic_0001>
module attributes {stable_mosaic.version = 11 : i64} {
  func.func @_l2_norm_kernel(%arg0: i32, %arg1: memref<8x512xf32, #tpu.memory_space<vmem>>, %arg2: memref<8x512xf32, #tpu.memory_space<vmem>>) attributes {dimension_semantics = [#tpu.dimension_semantics<parallel>], iteration_bounds = array<i64: 1>, scalar_prefetch = 0 : i64, scratch_operands = 0 : i64, tpu.core_type = #tpu.core_type<tc>, window_params = [{transform_indices = @transform_0, window_bounds = array<i64: 8, 512>}, {transform_indices = @transform_1, window_bounds = array<i64: 8, 512>}]} {
    %c0 = arith.constant 0 : index
    %c0_0 = arith.constant 0 : index
    %0 = vector.load %arg1[%c0, %c0_0] : memref<8x512xf32, #tpu.memory_space<vmem>>, vector<8x512xf32>
    %1 = arith.mulf %0, %0 : vector<8x512xf32>
    %cst = arith.constant dense<0.000000e+00> : vector<8xf32>
    %2 = vector.multi_reduction <add>, %1, %cst [1] : vector<8x512xf32> to vector<8xf32>
    %3 = vector.shape_cast %2 : vector<8xf32> to vector<8x1xf32>
    %4 = math.rsqrt %3 : vector<8x1xf32>
    %5 = vector.broadcast %4 : vector<8x1xf32> to vector<8x512xf32>
    %6 = arith.mulf %0, %5 : vector<8x512xf32>
    %c0_1 = arith.constant 0 : index
    %c0_2 = arith.constant 0 : index
    %7 = vector.load %arg2[%c0_1, %c0_2] : memref<8x512xf32, #tpu.memory_space<vmem>>, vector<8x512xf32>
    tpu.vector_store %arg2[%c0_1, %c0_2], %6 {strides = array<i32>} : memref<8x512xf32, #tpu.memory_space<vmem>>, vector<8x512xf32>,
    return
  }
  func.func @transform_0(%arg0: i32) -> (i32, i32) {
    %c0_i32 = arith.constant 0 : i32
    %c0_i32_0 = arith.constant 0 : i32
    return %arg0, %c0_i32 : i32, i32
  }
  func.func @transform_1(%arg0: i32) -> (i32, i32) {
    %c0_i32 = arith.constant 0 : i32
    %c0_i32_0 = arith.constant 0 : i32
    return %arg0, %c0_i32 : i32, i32
  }
}

</mosaic_0001>

<llo_original>
// kernel: tpu_custom_call.1
$region0: #{tpu_custom_call.1}
  #allocation0 [shape = 'u32[]', space=smem, size = 0x4, offset = 0x4, fixed_abs, tag = 'smem constant byte address 0x4 - core index']
  #allocation1 [shape = 'u32[144,128]{1,0:T(1,128)}', space=vmem, size = 0x12000, scoped, tag = 'internal scratch']
  %s0 = inlined_call_operand.hbm [shape: f32[8,512], index: 0, kind: input, shape index: {}]
  %s1 = inlined_call_operand.hbm [shape: f32[8,512], index: 1, kind: output, shape index: {}]
  %s2 = sld [smem:[#allocation0]]
  $region18: #{tpu_custom_call.1} parent=0
    _
  %s4 = ssub.s32 1, %s2
  %s5 = scalar_select 0, %s4, %s2
  $region1: #{tpu_custom_call.1} parent=0
    #allocation2 [shape = 'u8[16384]{0}', space=vmem, size = 0x4000, scoped, tag = 'input window, operand 0, single buffered']
    #allocation3 [shape = 's32[1]{0}', space=sflag, size = 0x4, scoped, tag = 'scoped memory for tpu_custom_call.1']
    #allocation4 [shape = 's32[1]{0}', space=sflag, size = 0x4, scoped, tag = 'scoped memory for tpu_custom_call.1']
    #allocation5 [shape = 'u8[16384]{0}', space=vmem, size = 0x4000, scoped, tag = 'output window, operand 0, single buffered']
    %6 = vsyncpa [#allocation3], 0
    %7 = vsyncpa [#allocation4], 0
    // Predicated region
    $region2: #{tpu_custom_call.1} parent=1 // pred_check
      _
    $region3: #{tpu_custom_call.1} parent=1 // pred_check_branch
      %9 = sbr.rel (0) target = $region5
    $region4: #{tpu_custom_call.1} parent=1 // pred_region
      %s11 = ssub.s32 512, 512
      %12 = vsyncadd [#allocation3], %s11
      %s14 = sshll.u32 [#allocation2], 4
      %s15 = int_to_ptr.vmem [resolvable:$true] %s14
      %17 = dma.hbm_to_vmem [thread:$0]  %s0, 512, %s15, [#allocation3]
    $region5: #{tpu_custom_call.1} parent=1 // pred_fallthru
      _
    // Predicated region
    $region6: #{tpu_custom_call.1} parent=1 // pred_check
      _
    $region7: #{tpu_custom_call.1} parent=1 // pred_check_branch
      %19 = sbr.rel (0) target = $region9
    $region8: #{tpu_custom_call.1} parent=1 // pred_region
      %20 = dma.done [#allocation3], 512
    $region9: #{tpu_custom_call.1} parent=1 // pred_fallthru
      _
    %v21 = vld [vmem:[#allocation2] sm:$0xff]
    %v22 = vld [vmem:[#allocation2 + $0x8] sm:$0xff]
    %v23 = vld [vmem:[#allocation2 + $0x10] sm:$0xff]
    %v24 = vld [vmem:[#allocation2 + $0x18] sm:$0xff]
    %v25 = vmul.f32 %v21, %v21
    %v26 = vmul.f32 %v22, %v22
    %v27 = vmul.f32 %v23, %v23
    %v28 = vmul.f32 %v24, %v24
    %v29 = vadd.f32 %v25, %v26
    %v30 = vadd.f32 %v29, %v27
    %v31 = vadd.f32 %v30, %v28
    %32 = vadd.xlane.f32.xlu0 %v31
    %v33 = vpop.xlane.xlu0 %32
    %v34 = vrsqrt.pop %v33
    %v35 = vmul.f32 %v21, %v34
    %v36 = vmul.f32 %v22, %v34
    %v37 = vmul.f32 %v23, %v34
    %v38 = vmul.f32 %v24, %v34
    %39 = vst [vmem:[#allocation5] sm:$0xff] %v35
    %40 = vst [vmem:[#allocation5 + $0x8] sm:$0xff] %v36
    %41 = vst [vmem:[#allocation5 + $0x10] sm:$0xff] %v37
    %42 = vst [vmem:[#allocation5 + $0x18] sm:$0xff] %v38
    // Predicated region
    $region10: #{tpu_custom_call.1} parent=1 // pred_check
      _
    $region11: #{tpu_custom_call.1} parent=1 // pred_check_branch
      %44 = sbr.rel (0) target = $region13
    $region12: #{tpu_custom_call.1} parent=1 // pred_region
      %s46 = ssub.s32 512, 512
      %47 = vsyncadd [#allocation4], %s46
      %s49 = sshll.u32 [#allocation5], 4
      %s50 = int_to_ptr.vmem [resolvable:$true] %s49
      %52 = dma.vmem_to_hbm [thread:$0]  %s50, 512, %s1, [#allocation4]
    $region13: #{tpu_custom_call.1} parent=1 // pred_fallthru
      _
    // Predicated region
    $region14: #{tpu_custom_call.1} parent=1 // pred_check
      _
    $region15: #{tpu_custom_call.1} parent=1 // pred_check_branch
      %54 = sbr.rel (0) target = $region17
    $region16: #{tpu_custom_call.1} parent=1 // pred_region
      %55 = dma.done [#allocation4], 512
    $region17: #{tpu_custom_call.1} parent=1 // pred_fallthru
      _
    %56 = vsyncpa [#allocation3], 1
    %57 = vsyncpa [#allocation4], 1

</llo_original>
